<compile_context>
chip_gen: v6e
topology: v6e:2x2x1
jax: 0.10.0
libtpu: 0.0.40
codegen_flags: <defaults>
</compile_context>

<pallas_src>
import functools

import jax
import jax.numpy as jnp
from jax.experimental import pallas as pl
from jax.experimental.pallas import tpu as pltpu


def _patch_embed_kernel(x_ref, w_ref, b_ref, o_ref):
    # x_ref: (TM, K) bf16 patch rows; w_ref: (K, N) bf16; b_ref: (1, N) f32.
    acc = jnp.dot(x_ref[...], w_ref[...], preferred_element_type=jnp.float32)
    o_ref[...] = (acc + b_ref[...]).astype(o_ref.dtype)


def _round_up(a, b):
    return ((a + b - 1) // b) * b


def _pick_vmem_and_tm(M, K, N, in_bytes, out_bytes, tm_user):
    """Generation-aware scoped-VMEM limit and M tile size."""
    # Physical VMEM per core (v5e/v6e: 128 MiB, v7x: 64 MiB).  Fall back to the
    # smallest (v7x) so a failed query can never over-budget.
    try:
        vmem_phys = int(pltpu.get_tpu_info().vmem_capacity_bytes)
    except Exception:
        vmem_phys = 64 * 1024 * 1024
    # Scoped limit: 3/4 of physical, capped at 96 MiB (64-96 MiB on v5e/v6e,
    # ~48 MiB on v7x), leaving headroom for compiler scratch.
    vmem_limit = min(vmem_phys * 3 // 4, 96 * 1024 * 1024)
    budget = int(vmem_limit * 0.85)

    # Double-buffered resident weight + bias; streamed x and out per M row.
    fixed = 2 * K * N * in_bytes + 2 * N * 4
    per_row = 2 * K * in_bytes + 2 * N * out_bytes
    tm_cap = max(8, (budget - fixed) // per_row)
    # TODO(synk): for very large emb_dim (>= 4k) add a second "parallel" N grid
    # axis instead of only shrinking tm (weight alone may not fit v7x VMEM).

    tm_default = 2048 if vmem_phys >= 100 * 1024 * 1024 else 1024
    tm = tm_default if tm_user is None else tm_user
    tm = min(tm, tm_cap)
    # Megacore: v7x has 2 TensorCores — make sure the "parallel" M axis has at
    # least 2 grid steps so one core is never idle (harmless on v5e/v6e).
    if M >= 16:
        tm = min(tm, _round_up(pl.cdiv(M, 2), 8))
    tm = min(tm, M)
    if tm < M:
        tm = max(8, (tm // 8) * 8)   # (8,128) rule for non-full blocks
    return int(vmem_limit), int(tm)


def patch_embedding(x, weight, bias, patch_size, *, tm=None,
                    compute_dtype=jnp.bfloat16, out_dtype=None,
                    allow_input_fusion=True):
    """ViT patch embedding: Conv2d(stride=kernel=P) -> flatten(2) -> transpose(1,2).

    x: (B, C, H, W). weight: (E, C, P, P) (PyTorch OIHW). bias: (E,).
    Returns (B, (H//P)*(W//P), E) in `out_dtype`.  `out_dtype` defaults to
    `compute_dtype` (bf16): the kernel is HBM-bound, so a bf16 writeback halves
    the dominant traffic term — pass out_dtype=x.dtype if f32 output is needed.
    """
    if out_dtype is None:
        out_dtype = compute_dtype
    B, C, H, W = x.shape
    E = weight.shape[0]
    P = patch_size
    nph, npw = H // P, W // P
    num_patches = nph * npw
    M = B * num_patches
    K = C * P * P

    # ---- glue: layout only, zero FLOPs --------------------------------------
    # Crop (matches VALID-conv floor behaviour) and cast to bf16 *before* the
    # transpose so the im2col is a single fused read-f32/write-bf16 copy.
    # TODO(synk): to remove even that copy, gather patch rows inside the kernel
    # straight from NCHW x (BlockSpec over (b, patch-row) + in-VMEM regroup);
    # kept as XLA glue here for lowering robustness.
    xc = x[:, :, :nph * P, :npw * P].astype(compute_dtype)
    patches = xc.reshape(B, C, nph, P, npw, P)
    patches = patches.transpose(0, 2, 4, 1, 3, 5)        # (B, nph, npw, C, P, P)
    patches = patches.reshape(M, K)                      # (c, kh, kw) inner order

    w2 = weight.reshape(E, K).T.astype(compute_dtype)    # (K, E)
    b2 = bias.reshape(1, E).astype(jnp.float32)

    # Pad the output/lane dim to a multiple of 128: avoids masked partial
    # stores and under-filled MXU columns when emb_dim is not lane-aligned.
    N = _round_up(E, 128)
    if N != E:
        w2 = jnp.pad(w2, ((0, 0), (0, N - E)))
        b2 = jnp.pad(b2, ((0, 0), (0, N - E)))

    in_bytes = jnp.dtype(compute_dtype).itemsize
    out_bytes = jnp.dtype(out_dtype).itemsize
    vmem_limit, tm = _pick_vmem_and_tm(M, K, N, in_bytes, out_bytes, tm)

    out = pl.pallas_call(
        _patch_embed_kernel,
        out_shape=jax.ShapeDtypeStruct((M, N), out_dtype),
        grid=(pl.cdiv(M, tm),),
        in_specs=[
            pl.BlockSpec((tm, K), lambda i: (i, 0)),     # streamed patch rows
            pl.BlockSpec((K, N), lambda i: (0, 0)),      # resident weight
            pl.BlockSpec((1, N), lambda i: (0, 0)),      # resident bias
        ],
        out_specs=pl.BlockSpec((tm, N), lambda i: (i, 0)),
        compiler_params=pltpu.CompilerParams(
            # Single M axis is data-parallel -> sharded across TensorCores on
            # megacore parts (v7x); harmless on v5e/v6e.
            dimension_semantics=("parallel",),
            vmem_limit_bytes=vmem_limit,
            # Hint XLA to fold the im2col producer into the kernel's input
            # instead of round-tripping the patches through HBM (advisory).
            allow_input_fusion=[True, False, False] if allow_input_fusion else None,
        ),
        cost_estimate=pl.CostEstimate(
            flops=2 * M * K * N,
            transcendentals=0,
            bytes_accessed=in_bytes * (M * K + K * N) + 4 * N + out_bytes * M * N,
        ),
    )(patches, w2, b2)

    if N != E:
        # Fused by XLA into the trailing reshape copy; skipped entirely for the
        # common lane-aligned ViT emb_dim.
        out = out[:, :E]
    return out.reshape(B, num_patches, E)


if __name__ == "__main__":
    # Small shapes consistent with the module: emb_dim = patch_size**2 * in_channels.
    B, C, H, W = 2, 4, 16, 16
    P = 8
    E = P * P * C  # 256 (lane-aligned)

    key = jax.random.PRNGKey(0)
    kx, kw, kb = jax.random.split(key, 3)
    x = jax.random.normal(kx, (B, C, H, W), dtype=jnp.float32)
    weight = jax.random.normal(kw, (E, C, P, P), dtype=jnp.float32) * 0.02
    bias = jax.random.normal(kb, (E,), dtype=jnp.float32) * 0.02

    # Jit the whole embed so the patch reshape/transpose can fuse into the
    # kernel's input.  If the input-fusion hint is rejected by the current
    # jax/libtpu, fall back to the identical kernel without it.
    try:
        fn = jax.jit(functools.partial(patch_embedding, patch_size=P,
                                       allow_input_fusion=True))
        out = jax.block_until_ready(fn(x, weight, bias))
    except Exception:
        fn = jax.jit(functools.partial(patch_embedding, patch_size=P,
                                       allow_input_fusion=False))
        out = jax.block_until_ready(fn(x, weight, bias))

    nph, npw = H // P, W // P
    assert out.shape == (B, nph * npw, E)
    out_f32 = out.astype(jnp.float32)

    # Reference 1: same bf16 operands through a plain XLA matmul (isolates the
    # kernel's MXU math; only difference is the final bf16 output rounding).
    p_ref = x.astype(jnp.bfloat16).reshape(B, C, nph, P, npw, P)
    p_ref = p_ref.transpose(0, 2, 4, 1, 3, 5).reshape(B * nph * npw, C * P * P)
    w_ref = weight.reshape(E, C * P * P).T.astype(jnp.bfloat16)
    ref1 = (jnp.dot(p_ref.astype(jnp.float32), w_ref.astype(jnp.float32))
            + bias[None, :]).reshape(B, nph * npw, E)
    assert jnp.allclose(out_f32, ref1, atol=1e-2, rtol=1e-2), "kernel vs bf16 matmul ref"

    # Reference 2: full-precision strided conv (PyTorch Conv2d semantics);
    # looser tolerance accounts for the intentional bf16 operand cast + bf16 output.
    ref2 = jax.lax.conv_general_dilated(
        x, weight, window_strides=(P, P), padding="VALID",
        dimension_numbers=("NCHW", "OIHW", "NCHW"))
    ref2 = ref2 + bias.reshape(1, E, 1, 1)
    ref2 = ref2.reshape(B, E, -1).transpose(0, 2, 1)
    assert jnp.allclose(out_f32, ref2, atol=6e-2, rtol=6e-2), "kernel vs f32 conv ref"

    print("KERNEL_OK")
</pallas_src>

<mosaic_0001>
module attributes {stable_mosaic.version = 11 : i64} {
  func.func @_patch_embed_kernel(%arg0: i32, %arg1: memref<8x256xbf16, #tpu.memory_space<vmem>>, %arg2: memref<256x256xbf16, #tpu.memory_space<vmem>>, %arg3: memref<1x256xf32, #tpu.memory_space<vmem>>, %arg4: memref<8x256xbf16, #tpu.memory_space<vmem>>) attributes {dimension_semantics = [#tpu.dimension_semantics<parallel>], iteration_bounds = array<i64: 1>, scalar_prefetch = 0 : i64, scratch_operands = 0 : i64, tpu.core_type = #tpu.core_type<tc>, window_params = [{transform_indices = @transform_0, window_bounds = array<i64: 8, 256>}, {pipeline_mode = #tpu.pipeline_mode<synchronous>, transform_indices = @transform_1, window_bounds = array<i64: 256, 256>}, {pipeline_mode = #tpu.pipeline_mode<synchronous>, transform_indices = @transform_2, window_bounds = array<i64: 1, 256>}, {transform_indices = @transform_3, window_bounds = array<i64: 8, 256>}]} {
    %c0 = arith.constant 0 : index
    %c0_0 = arith.constant 0 : index
    %0 = vector.load %arg1[%c0, %c0_0] : memref<8x256xbf16, #tpu.memory_space<vmem>>, vector<8x256xbf16>
    %c0_1 = arith.constant 0 : index
    %c0_2 = arith.constant 0 : index
    %1 = vector.load %arg2[%c0_1, %c0_2] : memref<256x256xbf16, #tpu.memory_space<vmem>>, vector<256x256xbf16>
    %cst = arith.constant dense<0.000000e+00> : vector<8x256xf32>
    %2 = tpu.matmul %0, %1, %cst {dimension_numbers = #tpu.dot_dimension_numbers<[1], [0], [0], [1], [0, 0, 1, 1], [], []>} : vector<8x256xbf16>, vector<256x256xbf16>, vector<8x256xf32> -> vector<8x256xf32>
    %c0_3 = arith.constant 0 : index
    %c0_4 = arith.constant 0 : index
    %3 = vector.load %arg3[%c0_3, %c0_4] : memref<1x256xf32, #tpu.memory_space<vmem>>, vector<1x256xf32>
    %4 = vector.broadcast %3 : vector<1x256xf32> to vector<8x256xf32>
    %5 = arith.addf %2, %4 : vector<8x256xf32>
    %6 = arith.truncf %5 : vector<8x256xf32> to vector<8x256xbf16>
    %c0_5 = arith.constant 0 : index
    %c0_6 = arith.constant 0 : index
    %7 = vector.load %arg4[%c0_5, %c0_6] : memref<8x256xbf16, #tpu.memory_space<vmem>>, vector<8x256xbf16>
    tpu.vector_store %arg4[%c0_5, %c0_6], %6 {strides = array<i32>} : memref<8x256xbf16, #tpu.memory_space<vmem>>, vector<8x256xbf16>,
    return
  }
  func.func @transform_0(%arg0: i32) -> (i32, i32) {
    %c0_i32 = arith.constant 0 : i32
    %c0_i32_0 = arith.constant 0 : i32
    return %arg0, %c0_i32 : i32, i32
  }
  func.func @transform_1(%arg0: i32) -> (i32, i32) {
    %c0_i32 = arith.constant 0 : i32
    %c0_i32_0 = arith.constant 0 : i32
    %c0_i32_1 = arith.constant 0 : i32
    return %c0_i32, %c0_i32_0 : i32, i32
  }
  func.func @transform_2(%arg0: i32) -> (i32, i32) {
    %c0_i32 = arith.constant 0 : i32
    %c0_i32_0 = arith.constant 0 : i32
    %c0_i32_1 = arith.constant 0 : i32
    return %c0_i32, %c0_i32_0 : i32, i32
  }
  func.func @transform_3(%arg0: i32) -> (i32, i32) {
    %c0_i32 = arith.constant 0 : i32
    %c0_i32_0 = arith.constant 0 : i32
    return %arg0, %c0_i32 : i32, i32
  }
}

module attributes {stable_mosaic.version = 11 : i64} {
  func.func @_patch_embed_kernel(%arg0: i32, %arg1: memref<8x256xbf16, #tpu.memory_space<vmem>>, %arg2: memref<256x256xbf16, #tpu.memory_space<vmem>>, %arg3: memref<1x256xf32, #tpu.memory_space<vmem>>, %arg4: memref<8x256xbf16, #tpu.memory_space<vmem>>) attributes {dimension_semantics = [#tpu.dimension_semantics<parallel>], iteration_bounds = array<i64: 1>, scalar_prefetch = 0 : i64, scratch_operands = 0 : i64, tpu.core_type = #tpu.core_type<tc>, window_params = [{transform_indices = @transform_0, window_bounds = array<i64: 8, 256>}, {pipeline_mode = #tpu.pipeline_mode<synchronous>, transform_indices = @transform_1, window_bounds = array<i64: 256, 256>}, {pipeline_mode = #tpu.pipeline_mode<synchronous>, transform_indices = @transform_2, window_bounds = array<i64: 1, 256>}, {transform_indices = @transform_3, window_bounds = array<i64: 8, 256>}]} {
    %c0 = arith.constant 0 : index
    %c0_0 = arith.constant 0 : index
    %0 = vector.load %arg1[%c0, %c0_0] : memref<8x256xbf16, #tpu.memory_space<vmem>>, vector<8x256xbf16>
    %c0_1 = arith.constant 0 : index
    %c0_2 = arith.constant 0 : index
    %1 = vector.load %arg2[%c0_1, %c0_2] : memref<256x256xbf16, #tpu.memory_space<vmem>>, vector<256x256xbf16>
    %cst = arith.constant dense<0.000000e+00> : vector<8x256xf32>
    %2 = tpu.matmul %0, %1, %cst {dimension_numbers = #tpu.dot_dimension_numbers<[1], [0], [0], [1], [0, 0, 1, 1], [], []>} : vector<8x256xbf16>, vector<256x256xbf16>, vector<8x256xf32> -> vector<8x256xf32>
    %c0_3 = arith.constant 0 : index
    %c0_4 = arith.constant 0 : index
    %3 = vector.load %arg3[%c0_3, %c0_4] : memref<1x256xf32, #tpu.memory_space<vmem>>, vector<1x256xf32>
    %4 = vector.broadcast %3 : vector<1x256xf32> to vector<8x256xf32>
    %5 = arith.addf %2, %4 : vector<8x256xf32>
    %6 = arith.truncf %5 : vector<8x256xf32> to vector<8x256xbf16>
    %c0_5 = arith.constant 0 : index
    %c0_6 = arith.constant 0 : index
    %7 = vector.load %arg4[%c0_5, %c0_6] : memref<8x256xbf16, #tpu.memory_space<vmem>>, vector<8x256xbf16>
    tpu.vector_store %arg4[%c0_5, %c0_6], %6 {strides = array<i32>} : memref<8x256xbf16, #tpu.memory_space<vmem>>, vector<8x256xbf16>,
    return
  }
  func.func @transform_0(%arg0: i32) -> (i32, i32) {
    %c0_i32 = arith.constant 0 : i32
    %c0_i32_0 = arith.constant 0 : i32
    return %arg0, %c0_i32 : i32, i32
  }
  func.func @transform_1(%arg0: i32) -> (i32, i32) {
    %c0_i32 = arith.constant 0 : i32
    %c0_i32_0 = arith.constant 0 : i32
    %c0_i32_1 = arith.constant 0 : i32
    return %c0_i32, %c0_i32_0 : i32, i32
  }
  func.func @transform_2(%arg0: i32) -> (i32, i32) {
    %c0_i32 = arith.constant 0 : i32
    %c0_i32_0 = arith.constant 0 : i32
    %c0_i32_1 = arith.constant 0 : i32
    return %c0_i32, %c0_i32_0 : i32, i32
  }
  func.func @transform_3(%arg0: i32) -> (i32, i32) {
    %c0_i32 = arith.constant 0 : i32
    %c0_i32_0 = arith.constant 0 : i32
    return %arg0, %c0_i32 : i32, i32
  }
}

</mosaic_0001>

<llo_original>
// kernel: patch_embedding.1
$region0: #{patch_embedding.1}
  #allocation0 [shape = 'u32[]', space=smem, size = 0x4, offset = 0x4, fixed_abs, tag = 'smem constant byte address 0x4 - core index']
  #allocation1 [shape = 'u32[144,128]{1,0:T(1,128)}', space=vmem, size = 0x12000, scoped, tag = 'internal scratch']
  %s0 = inlined_call_operand.vmem [shape: bf16[8,256], index: 0, kind: input, shape index: {}]
  %s1 = inlined_call_operand.vmem [shape: bf16[256,256], index: 1, kind: input, shape index: {}]
  %s2 = inlined_call_operand.vmem [shape: f32[1,256], index: 2, kind: input, shape index: {}]
  %s3 = inlined_call_operand.vmem [shape: bf16[8,256], index: 3, kind: output, shape index: {}]
  %s4 = sld [smem:[#allocation0]]
  $region22: #{patch_embedding.1} parent=0
    _
  %s6 = ssub.s32 1, %s4
  %s7 = scalar_select 0, %s6, %s4
  // Predicated region
  $region2: #{patch_embedding.1} parent=0 // pred_check
    _
  $region3: #{patch_embedding.1} parent=0 // pred_check_branch
    %9 = sbr.rel (0) target = $region5
  $region4: #{patch_embedding.1} parent=0 // pred_region
    _
  $region5: #{patch_embedding.1} parent=0 // pred_fallthru
    _
  // Predicated region
  $region6: #{patch_embedding.1} parent=0 // pred_check
    _
  $region7: #{patch_embedding.1} parent=0 // pred_check_branch
    %11 = sbr.rel (0) target = $region9
  $region8: #{patch_embedding.1} parent=0 // pred_region
    _
  $region9: #{patch_embedding.1} parent=0 // pred_fallthru
    _
  // Predicated region
  $region10: #{patch_embedding.1} parent=0 // pred_check
    _
  $region11: #{patch_embedding.1} parent=0 // pred_check_branch
    %13 = sbr.rel (0) target = $region13
  $region12: #{patch_embedding.1} parent=0 // pred_region
    _
  $region13: #{patch_embedding.1} parent=0 // pred_fallthru
    _
  %v14 = vld [vmem:[%s0] sm:$0xff]
  %v15 = vld [vmem:[%s1] sm:$0xff]
  %v16 = vld [vmem:[%s1 + $0x8] sm:$0xff]
  %v17 = vld [vmem:[%s1 + $0x10] sm:$0xff]
  %v18 = vld [vmem:[%s1 + $0x18] sm:$0xff]
  %v19 = vld [vmem:[%s1 + $0x20] sm:$0xff]
  %v20 = vld [vmem:[%s1 + $0x28] sm:$0xff]
  %v21 = vld [vmem:[%s1 + $0x30] sm:$0xff]
  %v22 = vld [vmem:[%s1 + $0x38] sm:$0xff]
  %v23 = vld [vmem:[%s1 + $0x40] sm:$0xff]
  %v24 = vld [vmem:[%s1 + $0x48] sm:$0xff]
  %v25 = vld [vmem:[%s1 + $0x50] sm:$0xff]
  %v26 = vld [vmem:[%s1 + $0x58] sm:$0xff]
  %v27 = vld [vmem:[%s1 + $0x60] sm:$0xff]
  %v28 = vld [vmem:[%s1 + $0x68] sm:$0xff]
  %v29 = vld [vmem:[%s1 + $0x70] sm:$0xff]
  %v30 = vld [vmem:[%s1 + $0x78] sm:$0xff]
  %v31 = vld [vmem:[%s1 + $0x80] sm:$0xff]
  %v32 = vld [vmem:[%s1 + $0x88] sm:$0xff]
  %v33 = vld [vmem:[%s1 + $0x90] sm:$0xff]
  %v34 = vld [vmem:[%s1 + $0x98] sm:$0xff]
  %v35 = vld [vmem:[%s1 + $0xa0] sm:$0xff]
  %v36 = vld [vmem:[%s1 + $0xa8] sm:$0xff]
  %v37 = vld [vmem:[%s1 + $0xb0] sm:$0xff]
  %v38 = vld [vmem:[%s1 + $0xb8] sm:$0xff]
  %v39 = vld [vmem:[%s1 + $0xc0] sm:$0xff]
  %v40 = vld [vmem:[%s1 + $0xc8] sm:$0xff]
  %v41 = vld [vmem:[%s1 + $0xd0] sm:$0xff]
  %v42 = vld [vmem:[%s1 + $0xd8] sm:$0xff]
  %v43 = vld [vmem:[%s1 + $0xe0] sm:$0xff]
  %v44 = vld [vmem:[%s1 + $0xe8] sm:$0xff]
  %v45 = vld [vmem:[%s1 + $0xf0] sm:$0xff]
  %v46 = vld [vmem:[%s1 + $0xf8] sm:$0xff]
  %v47 = vld [vmem:[%s2] sm:$0x3]
  %v49 = vlaneseq
  %v50 = vshrl.u32 %v49, 7
  %v51 = vsub.s32 0, %v50
  %v52 = vrot.slane %v47, %v51
  %v53 = vlaneseq
  %v54 = vshrl.u32 %v53, 7
  %v55 = vsub.s32 1, %v54
  %v56 = vrot.slane %v47, %v55
  %v60 = vunpack.c.l.b16 %v14
  %v61 = vunpack.c.h.b16 %v14
  %v62 = vpack.c.b16 %v60, %v60
  %v63 = vpack.c.b16 %v61, %v61
  %v98 = vunpack.c.l.b16 %v15
  %v99 = vunpack.c.h.b16 %v15
  %v100 = vunpack.c.l.b16 %v16
  %v101 = vunpack.c.h.b16 %v16
  %v102 = vunpack.c.l.b16 %v17
  %v103 = vunpack.c.h.b16 %v17
  %v104 = vunpack.c.l.b16 %v18
  %v105 = vunpack.c.h.b16 %v18
  %v106 = vunpack.c.l.b16 %v19
  %v107 = vunpack.c.h.b16 %v19
  %v108 = vunpack.c.l.b16 %v20
  %v109 = vunpack.c.h.b16 %v20
  %v110 = vunpack.c.l.b16 %v21
  %v111 = vunpack.c.h.b16 %v21
  %v112 = vunpack.c.l.b16 %v22
  %v113 = vunpack.c.h.b16 %v22
  %v114 = vunpack.c.l.b16 %v23
  %v115 = vunpack.c.h.b16 %v23
  %v116 = vunpack.c.l.b16 %v24
  %v117 = vunpack.c.h.b16 %v24
  %v118 = vunpack.c.l.b16 %v25
  %v119 = vunpack.c.h.b16 %v25
  %v120 = vunpack.c.l.b16 %v26
  %v121 = vunpack.c.h.b16 %v26
  %v122 = vunpack.c.l.b16 %v27
  %v123 = vunpack.c.h.b16 %v27
  %v124 = vunpack.c.l.b16 %v28
  %v125 = vunpack.c.h.b16 %v28
  %v126 = vunpack.c.l.b16 %v29
  %v127 = vunpack.c.h.b16 %v29
  %v128 = vunpack.c.l.b16 %v30
  %v129 = vunpack.c.h.b16 %v30
  %v130 = vunpack.c.l.b16 %v31
  %v131 = vunpack.c.h.b16 %v31
  %v132 = vunpack.c.l.b16 %v32
  %v133 = vunpack.c.h.b16 %v32
  %v134 = vunpack.c.l.b16 %v33
  %v135 = vunpack.c.h.b16 %v33
  %v136 = vunpack.c.l.b16 %v34
  %v137 = vunpack.c.h.b16 %v34
  %v138 = vunpack.c.l.b16 %v35
  %v139 = vunpack.c.h.b16 %v35
  %v140 = vunpack.c.l.b16 %v36
  %v141 = vunpack.c.h.b16 %v36
  %v142 = vunpack.c.l.b16 %v37
  %v143 = vunpack.c.h.b16 %v37
  %v144 = vunpack.c.l.b16 %v38
  %v145 = vunpack.c.h.b16 %v38
  %v146 = vunpack.c.l.b16 %v39
  %v147 = vunpack.c.h.b16 %v39
  %v148 = vunpack.c.l.b16 %v40
  %v149 = vunpack.c.h.b16 %v40
  %v150 = vunpack.c.l.b16 %v41
  %v151 = vunpack.c.h.b16 %v41
  %v152 = vunpack.c.l.b16 %v42
  %v153 = vunpack.c.h.b16 %v42
  %v154 = vunpack.c.l.b16 %v43
  %v155 = vunpack.c.h.b16 %v43
  %v156 = vunpack.c.l.b16 %v44
  %v157 = vunpack.c.h.b16 %v44
  %v158 = vunpack.c.l.b16 %v45
  %v159 = vunpack.c.h.b16 %v45
  %v160 = vunpack.c.l.b16 %v46
  %v161 = vunpack.c.h.b16 %v46
  %v162 = vpack.c.b16 %v100, %v98
  %v163 = vpack.c.b16 %v101, %v99
  %v164 = vpack.c.b16 %v104, %v102
  %v165 = vpack.c.b16 %v105, %v103
  %v166 = vpack.c.b16 %v108, %v106
  %v167 = vpack.c.b16 %v109, %v107
  %v168 = vpack.c.b16 %v112, %v110
  %v169 = vpack.c.b16 %v113, %v111
  %v170 = vpack.c.b16 %v116, %v114
  %v171 = vpack.c.b16 %v117, %v115
  %v172 = vpack.c.b16 %v120, %v118
  %v173 = vpack.c.b16 %v121, %v119
  %v174 = vpack.c.b16 %v124, %v122
  %v175 = vpack.c.b16 %v125, %v123
  %v176 = vpack.c.b16 %v128, %v126
  %v177 = vpack.c.b16 %v129, %v127
  %v178 = vpack.c.b16 %v132, %v130
  %v179 = vpack.c.b16 %v133, %v131
  %v180 = vpack.c.b16 %v136, %v134
  %v181 = vpack.c.b16 %v137, %v135
  %v182 = vpack.c.b16 %v140, %v138
  %v183 = vpack.c.b16 %v141, %v139
  %v184 = vpack.c.b16 %v144, %v142
  %v185 = vpack.c.b16 %v145, %v143
  %v186 = vpack.c.b16 %v148, %v146
  %v187 = vpack.c.b16 %v149, %v147
  %v188 = vpack.c.b16 %v152, %v150
  %v189 = vpack.c.b16 %v153, %v151
  %v190 = vpack.c.b16 %v156, %v154
  %v191 = vpack.c.b16 %v157, %v155
  %v192 = vpack.c.b16 %v160, %v158
  %v193 = vpack.c.b16 %v161, %v159
  %226 = vmatprep.subr.bf16.mxu0 %v177
  %227 = vmatpush1.bf16.msra.mxu0 %v176
  %228 = vmatprep.subr.bf16.mxu0 %v175
  %229 = vmatpush1.bf16.msra.mxu0 %v174
  %230 = vmatprep.subr.bf16.mxu0 %v173
  %231 = vmatpush1.bf16.msra.mxu0 %v172
  %232 = vmatprep.subr.bf16.mxu0 %v171
  %233 = vmatpush1.bf16.msra.mxu0 %v170
  %234 = vmatprep.subr.bf16.mxu0 %v169
  %235 = vmatpush1.bf16.msra.mxu0 %v168
  %236 = vmatprep.subr.bf16.mxu0 %v167
  %237 = vmatpush1.bf16.msra.mxu0 %v166
  %238 = vmatprep.subr.bf16.mxu0 %v165
  %239 = vmatpush1.bf16.msra.mxu0 %v164
  %240 = vmatprep.subr.bf16.mxu0 %v163
  %241 = vmatpush1.bf16.msra.mxu0 %v162
  %242 = vmatprep.subr.bf16.mxu0 %v193
  %243 = vmatpush2.bf16.msra.mxu0 %v192
  %244 = vmatprep.subr.bf16.mxu0 %v191
  %245 = vmatpush2.bf16.msra.mxu0 %v190
  %246 = vmatprep.subr.bf16.mxu0 %v189
  %247 = vmatpush2.bf16.msra.mxu0 %v188
  %248 = vmatprep.subr.bf16.mxu0 %v187
  %249 = vmatpush2.bf16.msra.mxu0 %v186
  %250 = vmatprep.subr.bf16.mxu0 %v185
  %251 = vmatpush2.bf16.msra.mxu0 %v184
  %252 = vmatprep.subr.bf16.mxu0 %v183
  %253 = vmatpush2.bf16.msra.mxu0 %v182
  %254 = vmatprep.subr.bf16.mxu0 %v181
  %255 = vmatpush2.bf16.msra.mxu0 %v180
  %256 = vmatprep.subr.bf16.mxu0 %v179
  %257 = vmatpush2.bf16.msra.mxu0 %v178
  %258 = vmatprep.mubr.bf16.mxu0 %v63
  %259 = vmatmul.mubr.bf16.gmra.mxu0 %v62
  %v260 = vpop.f32.mrf.mxu0
  %v261 = vadd.f32 %v52, %v260
  %v262 = vpop.f32.mrf.mxu0
  %v263 = vadd.f32 %v56, %v262
  %v264 = vpop.f32.mrf.mxu0
  %v265 = vpop.f32.mrf.mxu0
  %266 = vdwg.mxu0
  %v267 = vpack.c.bf16 %v261, %v261
  %v268 = vpack.c.bf16 %v263, %v263
  %v271 = vunpack.c.l.b16 %v267
  %v272 = vunpack.c.l.b16 %v268
  %v273 = vpack.c.b16 %v272, %v271
  %275 = vst [vmem:[%s3] sm:$0xff] %v273
  // Predicated region
  $region14: #{patch_embedding.1} parent=0 // pred_check
    _
  $region15: #{patch_embedding.1} parent=0 // pred_check_branch
    %277 = sbr.rel (0) target = $region17
  $region16: #{patch_embedding.1} parent=0 // pred_region
    _
  $region17: #{patch_embedding.1} parent=0 // pred_fallthru
    _
  // Predicated region
  $region18: #{patch_embedding.1} parent=0 // pred_check
    _
  $region19: #{patch_embedding.1} parent=0 // pred_check_branch
    %279 = sbr.rel (0) target = $region21
  $region20: #{patch_embedding.1} parent=0 // pred_region
    _
  $region21: #{patch_embedding.1} parent=0 // pred_fallthru
    _

// kernel: patch_embedding.1
$region0: #{patch_embedding.1}
  #allocation0 [shape = 'u32[]', space=smem, size = 0x4, offset = 0x4, fixed_abs, tag = 'smem constant byte address 0x4 - core index']
  #allocation1 [shape = 'u32[144,128]{1,0:T(1,128)}', space=vmem, size = 0x12000, scoped, tag = 'internal scratch']
  %s0 = inlined_call_operand.vmem [shape: bf16[8,256], index: 0, kind: input, shape index: {}]
  %s1 = inlined_call_operand.vmem [shape: bf16[256,256], index: 1, kind: input, shape index: {}]
  %s2 = inlined_call_operand.vmem [shape: f32[1,256], index: 2, kind: input, shape index: {}]
  %s3 = inlined_call_operand.vmem [shape: bf16[8,256], index: 3, kind: output, shape index: {}]
  %s4 = sld [smem:[#allocation0]]
  $region22: #{patch_embedding.1} parent=0
    _
  %s6 = ssub.s32 1, %s4
  %s7 = scalar_select 0, %s6, %s4
  // Predicated region
  $region2: #{patch_embedding.1} parent=0 // pred_check
    _
  $region3: #{patch_embedding.1} parent=0 // pred_check_branch
    %9 = sbr.rel (0) target = $region5
  $region4: #{patch_embedding.1} parent=0 // pred_region
    _
  $region5: #{patch_embedding.1} parent=0 // pred_fallthru
    _
  // Predicated region
  $region6: #{patch_embedding.1} parent=0 // pred_check
    _
  $region7: #{patch_embedding.1} parent=0 // pred_check_branch
    %11 = sbr.rel (0) target = $region9
  $region8: #{patch_embedding.1} parent=0 // pred_region
    _
  $region9: #{patch_embedding.1} parent=0 // pred_fallthru
    _
  // Predicated region
  $region10: #{patch_embedding.1} parent=0 // pred_check
    _
  $region11: #{patch_embedding.1} parent=0 // pred_check_branch
    %13 = sbr.rel (0) target = $region13
  $region12: #{patch_embedding.1} parent=0 // pred_region
    _
  $region13: #{patch_embedding.1} parent=0 // pred_fallthru
    _
  %v14 = vld [vmem:[%s0] sm:$0xff]
  %v15 = vld [vmem:[%s1] sm:$0xff]
  %v16 = vld [vmem:[%s1 + $0x8] sm:$0xff]
  %v17 = vld [vmem:[%s1 + $0x10] sm:$0xff]
  %v18 = vld [vmem:[%s1 + $0x18] sm:$0xff]
  %v19 = vld [vmem:[%s1 + $0x20] sm:$0xff]
  %v20 = vld [vmem:[%s1 + $0x28] sm:$0xff]
  %v21 = vld [vmem:[%s1 + $0x30] sm:$0xff]
  %v22 = vld [vmem:[%s1 + $0x38] sm:$0xff]
  %v23 = vld [vmem:[%s1 + $0x40] sm:$0xff]
  %v24 = vld [vmem:[%s1 + $0x48] sm:$0xff]
  %v25 = vld [vmem:[%s1 + $0x50] sm:$0xff]
  %v26 = vld [vmem:[%s1 + $0x58] sm:$0xff]
  %v27 = vld [vmem:[%s1 + $0x60] sm:$0xff]
  %v28 = vld [vmem:[%s1 + $0x68] sm:$0xff]
  %v29 = vld [vmem:[%s1 + $0x70] sm:$0xff]
  %v30 = vld [vmem:[%s1 + $0x78] sm:$0xff]
  %v31 = vld [vmem:[%s1 + $0x80] sm:$0xff]
  %v32 = vld [vmem:[%s1 + $0x88] sm:$0xff]
  %v33 = vld [vmem:[%s1 + $0x90] sm:$0xff]
  %v34 = vld [vmem:[%s1 + $0x98] sm:$0xff]
  %v35 = vld [vmem:[%s1 + $0xa0] sm:$0xff]
  %v36 = vld [vmem:[%s1 + $0xa8] sm:$0xff]
  %v37 = vld [vmem:[%s1 + $0xb0] sm:$0xff]
  %v38 = vld [vmem:[%s1 + $0xb8] sm:$0xff]
  %v39 = vld [vmem:[%s1 + $0xc0] sm:$0xff]
  %v40 = vld [vmem:[%s1 + $0xc8] sm:$0xff]
  %v41 = vld [vmem:[%s1 + $0xd0] sm:$0xff]
  %v42 = vld [vmem:[%s1 + $0xd8] sm:$0xff]
  %v43 = vld [vmem:[%s1 + $0xe0] sm:$0xff]
  %v44 = vld [vmem:[%s1 + $0xe8] sm:$0xff]
  %v45 = vld [vmem:[%s1 + $0xf0] sm:$0xff]
  %v46 = vld [vmem:[%s1 + $0xf8] sm:$0xff]
  %v47 = vld [vmem:[%s2] sm:$0x3]
  %v49 = vlaneseq
  %v50 = vshrl.u32 %v49, 7
  %v51 = vsub.s32 0, %v50
  %v52 = vrot.slane %v47, %v51
  %v53 = vlaneseq
  %v54 = vshrl.u32 %v53, 7
  %v55 = vsub.s32 1, %v54
  %v56 = vrot.slane %v47, %v55
  %v60 = vunpack.c.l.b16 %v14
  %v61 = vunpack.c.h.b16 %v14
  %v62 = vpack.c.b16 %v60, %v60
  %v63 = vpack.c.b16 %v61, %v61
  %v98 = vunpack.c.l.b16 %v15
  %v99 = vunpack.c.h.b16 %v15
  %v100 = vunpack.c.l.b16 %v16
  %v101 = vunpack.c.h.b16 %v16
  %v102 = vunpack.c.l.b16 %v17
  %v103 = vunpack.c.h.b16 %v17
  %v104 = vunpack.c.l.b16 %v18
  %v105 = vunpack.c.h.b16 %v18
  %v106 = vunpack.c.l.b16 %v19
  %v107 = vunpack.c.h.b16 %v19
  %v108 = vunpack.c.l.b16 %v20
  %v109 = vunpack.c.h.b16 %v20
  %v110 = vunpack.c.l.b16 %v21
  %v111 = vunpack.c.h.b16 %v21
  %v112 = vunpack.c.l.b16 %v22
  %v113 = vunpack.c.h.b16 %v22
  %v114 = vunpack.c.l.b16 %v23
  %v115 = vunpack.c.h.b16 %v23
  %v116 = vunpack.c.l.b16 %v24
  %v117 = vunpack.c.h.b16 %v24
  %v118 = vunpack.c.l.b16 %v25
  %v119 = vunpack.c.h.b16 %v25
  %v120 = vunpack.c.l.b16 %v26
  %v121 = vunpack.c.h.b16 %v26
  %v122 = vunpack.c.l.b16 %v27
  %v123 = vunpack.c.h.b16 %v27
  %v124 = vunpack.c.l.b16 %v28
  %v125 = vunpack.c.h.b16 %v28
  %v126 = vunpack.c.l.b16 %v29
  %v127 = vunpack.c.h.b16 %v29
  %v128 = vunpack.c.l.b16 %v30
  %v129 = vunpack.c.h.b16 %v30
  %v130 = vunpack.c.l.b16 %v31
  %v131 = vunpack.c.h.b16 %v31
  %v132 = vunpack.c.l.b16 %v32
  %v133 = vunpack.c.h.b16 %v32
  %v134 = vunpack.c.l.b16 %v33
  %v135 = vunpack.c.h.b16 %v33
  %v136 = vunpack.c.l.b16 %v34
  %v137 = vunpack.c.h.b16 %v34
  %v138 = vunpack.c.l.b16 %v35
  %v139 = vunpack.c.h.b16 %v35
  %v140 = vunpack.c.l.b16 %v36
  %v141 = vunpack.c.h.b16 %v36
  %v142 = vunpack.c.l.b16 %v37
  %v143 = vunpack.c.h.b16 %v37
  %v144 = vunpack.c.l.b16 %v38
  %v145 = vunpack.c.h.b16 %v38
  %v146 = vunpack.c.l.b16 %v39
  %v147 = vunpack.c.h.b16 %v39
  %v148 = vunpack.c.l.b16 %v40
  %v149 = vunpack.c.h.b16 %v40
  %v150 = vunpack.c.l.b16 %v41
  %v151 = vunpack.c.h.b16 %v41
  %v152 = vunpack.c.l.b16 %v42
  %v153 = vunpack.c.h.b16 %v42
  %v154 = vunpack.c.l.b16 %v43
  %v155 = vunpack.c.h.b16 %v43
  %v156 = vunpack.c.l.b16 %v44
  %v157 = vunpack.c.h.b16 %v44
  %v158 = vunpack.c.l.b16 %v45
  %v159 = vunpack.c.h.b16 %v45
  %v160 = vunpack.c.l.b16 %v46
  %v161 = vunpack.c.h.b16 %v46
  %v162 = vpack.c.b16 %v100, %v98
  %v163 = vpack.c.b16 %v101, %v99
  %v164 = vpack.c.b16 %v104, %v102
  %v165 = vpack.c.b16 %v105, %v103
  %v166 = vpack.c.b16 %v108, %v106
  %v167 = vpack.c.b16 %v109, %v107
  %v168 = vpack.c.b16 %v112, %v110
  %v169 = vpack.c.b16 %v113, %v111
  %v170 = vpack.c.b16 %v116, %v114
  %v171 = vpack.c.b16 %v117, %v115
  %v172 = vpack.c.b16 %v120, %v118
  %v173 = vpack.c.b16 %v121, %v119
  %v174 = vpack.c.b16 %v124, %v122
  %v175 = vpack.c.b16 %v125, %v123
  %v176 = vpack.c.b16 %v128, %v126
  %v177 = vpack.c.b16 %v129, %v127
  %v178 = vpack.c.b16 %v132, %v130
  %v179 = vpack.c.b16 %v133, %v131
  %v180 = vpack.c.b16 %v136, %v134
  %v181 = vpack.c.b16 %v137, %v135
  %v182 = vpack.c.b16 %v140, %v138
  %v183 = vpack.c.b16 %v141, %v139
  %v184 = vpack.c.b16 %v144, %v142
  %v185 = vpack.c.b16 %v145, %v143
  %v186 = vpack.c.b16 %v148, %v146
  %v187 = vpack.c.b16 %v149, %v147
  %v188 = vpack.c.b16 %v152, %v150
  %v189 = vpack.c.b16 %v153, %v151
  %v190 = vpack.c.b16 %v156, %v154
  %v191 = vpack.c.b16 %v157, %v155
  %v192 = vpack.c.b16 %v160, %v158
  %v193 = vpack.c.b16 %v161, %v159
  %226 = vmatprep.subr.bf16.mxu0 %v177
  %227 = vmatpush1.bf16.msra.mxu0 %v176
  %228 = vmatprep.subr.bf16.mxu0 %v175
  %229 = vmatpush1.bf16.msra.mxu0 %v174
  %230 = vmatprep.subr.bf16.mxu0 %v173
  %231 = vmatpush1.bf16.msra.mxu0 %v172
  %232 = vmatprep.subr.bf16.mxu0 %v171
  %233 = vmatpush1.bf16.msra.mxu0 %v170
  %234 = vmatprep.subr.bf16.mxu0 %v169
  %235 = vmatpush1.bf16.msra.mxu0 %v168
  %236 = vmatprep.subr.bf16.mxu0 %v167
  %237 = vmatpush1.bf16.msra.mxu0 %v166
  %238 = vmatprep.subr.bf16.mxu0 %v165
  %239 = vmatpush1.bf16.msra.mxu0 %v164
  %240 = vmatprep.subr.bf16.mxu0 %v163
  %241 = vmatpush1.bf16.msra.mxu0 %v162
  %242 = vmatprep.subr.bf16.mxu0 %v193
  %243 = vmatpush2.bf16.msra.mxu0 %v192
  %244 = vmatprep.subr.bf16.mxu0 %v191
  %245 = vmatpush2.bf16.msra.mxu0 %v190
  %246 = vmatprep.subr.bf16.mxu0 %v189
  %247 = vmatpush2.bf16.msra.mxu0 %v188
  %248 = vmatprep.subr.bf16.mxu0 %v187
  %249 = vmatpush2.bf16.msra.mxu0 %v186
  %250 = vmatprep.subr.bf16.mxu0 %v185
  %251 = vmatpush2.bf16.msra.mxu0 %v184
  %252 = vmatprep.subr.bf16.mxu0 %v183
  %253 = vmatpush2.bf16.msra.mxu0 %v182
  %254 = vmatprep.subr.bf16.mxu0 %v181
  %255 = vmatpush2.bf16.msra.mxu0 %v180
  %256 = vmatprep.subr.bf16.mxu0 %v179
  %257 = vmatpush2.bf16.msra.mxu0 %v178
  %258 = vmatprep.mubr.bf16.mxu0 %v63
  %259 = vmatmul.mubr.bf16.gmra.mxu0 %v62
  %v260 = vpop.f32.mrf.mxu0
  %v261 = vadd.f32 %v52, %v260
  %v262 = vpop.f32.mrf.mxu0
  %v263 = vadd.f32 %v56, %v262
  %v264 = vpop.f32.mrf.mxu0
  %v265 = vpop.f32.mrf.mxu0
  %266 = vdwg.mxu0
  %v267 = vpack.c.bf16 %v261, %v261
  %v268 = vpack.c.bf16 %v263, %v263
  %v271 = vunpack.c.l.b16 %v267
  %v272 = vunpack.c.l.b16 %v268
  %v273 = vpack.c.b16 %v272, %v271
  %275 = vst [vmem:[%s3] sm:$0xff] %v273
  // Predicated region
  $region14: #{patch_embedding.1} parent=0 // pred_check
    _
  $region15: #{patch_embedding.1} parent=0 // pred_check_branch
    %277 = sbr.rel (0) target = $region17
  $region16: #{patch_embedding.1} parent=0 // pred_region
    _
  $region17: #{patch_embedding.1} parent=0 // pred_fallthru
    _
  // Predicated region
  $region18: #{patch_embedding.1} parent=0 // pred_check
    _
  $region19: #{patch_embedding.1} parent=0 // pred_check_branch
    %279 = sbr.rel (0) target = $region21
  $region20: #{patch_embedding.1} parent=0 // pred_region
    _
  $region21: #{patch_embedding.1} parent=0 // pred_fallthru
    _

</llo_original>
